<compile_context>
chip_gen: v7x
topology: tpu7x:2x2x1
jax: 0.10.0
libtpu: 0.0.40
codegen_flags: <defaults>
</compile_context>

<pallas_src>
from functools import partial

import numpy as np
import jax
import jax.numpy as jnp
from jax.experimental import pallas as pl
from jax.experimental.pallas import tpu as pltpu


# ----------------------------------------------------------------------------
# Mask sampling (exact replica of MADE._sample_masks, numpy only)
# ----------------------------------------------------------------------------
def sample_made_masks(input_dim, dims, n_masks=1, mask_seed=0):
    rng = np.random.RandomState(seed=mask_seed % n_masks)
    conn = [rng.permutation(input_dim)]
    for i, dim in enumerate(dims[1:-1]):
        low = 0 if i == 0 else np.min(conn[i - 1])
        high = input_dim - 1
        conn.append(rng.randint(low, high, size=dim))
    conn.append(np.copy(conn[0]))
    masks = [(conn[i - 1][None, :] <= conn[i][:, None]) for i in range(1, len(conn) - 1)]
    masks.append(conn[-2][None, :] < conn[-1][:, None])
    # PyTorch stores masks as uint8; they multiply float weights -> f32 here.
    return [m.astype(np.float32) for m in masks], conn[-1]


# ----------------------------------------------------------------------------
# Kernels
#   Layout A (batch on the 128-lane axis) -- for small feature dims:
#     x_ref : (input_dim, tile_n)   wm_ref: (out_d, in_d)   b_ref: (out_d, 1)
#     o_ref : (out_dim, tile_n)
#   Layout B (features on the lane axis) -- when in/out dims are 128-multiples:
#     x_ref : (tile_n, input_dim)   wm_ref: (out_d, in_d)   b_ref: (1, out_d)
#     o_ref : (tile_n, out_dim)
# ----------------------------------------------------------------------------
def _made_kernel_batch_lanes(num_layers, *refs):
    x_ref, o_ref = refs[0], refs[-1]
    h = x_ref[...].astype(jnp.float32)                       # (in_dim, tile_n)
    for l in range(num_layers):
        wm_ref = refs[1 + 2 * l]
        b_ref = refs[2 + 2 * l]
        z = jnp.dot(wm_ref[...], h.astype(wm_ref.dtype),
                    preferred_element_type=jnp.float32)      # MXU, f32 accumulate
        z = z + b_ref[...]                                   # (out_d, 1) broadcast
        h = jnp.maximum(z, 0.0) if l < num_layers - 1 else z
    o_ref[...] = h.astype(o_ref.dtype)


def _made_kernel_feature_lanes(num_layers, *refs):
    x_ref, o_ref = refs[0], refs[-1]
    h = x_ref[...].astype(jnp.float32)                       # (tile_n, in_dim)
    for l in range(num_layers):
        wm_ref = refs[1 + 2 * l]                             # (out_d, in_d)
        b_ref = refs[2 + 2 * l]                              # (1, out_d)
        z = jax.lax.dot_general(
            h.astype(wm_ref.dtype), wm_ref[...],
            dimension_numbers=(((1,), (1,)), ((), ())),      # h @ wm.T on the MXU
            preferred_element_type=jnp.float32)              # (tile_n, out_d)
        z = z + b_ref[...]
        h = jnp.maximum(z, 0.0) if l < num_layers - 1 else z
    o_ref[...] = h.astype(o_ref.dtype)


# ----------------------------------------------------------------------------
# Device introspection + tile chooser
# ----------------------------------------------------------------------------
def _device_info():
    vmem = 64 * 1024 * 1024          # conservative fallback (v7x per-TC VMEM)
    try:
        info = pltpu.get_tpu_info()
        cap = getattr(info, "vmem_capacity_bytes", None)
        if cap:
            vmem = int(cap)
    except Exception:
        pass
    num_tc = 1
    try:
        kind = jax.devices()[0].device_kind.lower()
        if "v7" in kind or "7x" in kind:
            num_tc = 2               # only 2-TC parts benefit from >= 2 "parallel" steps
    except Exception:
        pass
    return vmem, num_tc


def _round_up(a, b):
    return pl.cdiv(a, b) * b


def _choose_tile_n(n, max_cols, num_tc):
    """Largest lane(128)-granular batch tile that fits the VMEM budget.

    On single-TC chips (v5e/v6e) the grid is a sequential loop, so prefer one
    big tile; on 2-TC parts (v7x) keep >= 2 grid steps when the batch allows.
    """
    n128 = _round_up(n, 128)
    max_tile = max(128, min((max_cols // 128) * 128, n128))
    cands = sorted({c for c in (4096, 2048, 1024, 512, 256, 128, n128) if c <= max_tile},
                   reverse=True)
    for c in cands:
        if num_tc >= 2 and n128 > 128 and pl.cdiv(n128, c) < 2:
            continue
        return c
    return 128


def _const_spec(shape, use_buffered):
    # Grid-invariant operand: a single VMEM buffer is enough (no pipelining).
    if use_buffered:
        return pl.BlockSpec(shape, lambda i: (0, 0), pipeline_mode=pl.Buffered(1))
    return pl.BlockSpec(shape, lambda i: (0, 0))


# ----------------------------------------------------------------------------
# Wrapper
# ----------------------------------------------------------------------------
def made_forward(x, weights, biases, masks, tile_n=None, compute_dtype=jnp.float32):
    orig_shape = x.shape
    orig_dtype = x.dtype
    n = orig_shape[0]
    x2 = x.reshape(n, -1)
    input_dim = x2.shape[1]
    num_layers = len(weights)
    out_dim = weights[-1].shape[0]
    assert out_dim == input_dim, "MADE requires hidden_dims[-1] == input_dim"

    # Pre-mask weights once in the wrapper (keeps the VPU mask-mul and the
    # duplicated mask DMA out of the kernel). compute_dtype=bfloat16 is the
    # MXU fast path on v6e/v7x and halves weight HBM/VMEM traffic.
    wms = [(w * m).astype(compute_dtype) for w, m in zip(weights, masks)]
    wbytes = wms[0].dtype.itemsize
    in_itemsize = x.dtype.itemsize
    out_itemsize = jnp.dtype(orig_dtype).itemsize

    # Natural lane-dense layout only when both feature dims are 128-multiples;
    # otherwise keep batch on the lane axis (tiny toy dims would force masked,
    # lane-sparse loads/stores in the natural layout).
    feature_lanes = (input_dim % 128 == 0) and (out_dim % 128 == 0)

    vmem_cap, num_tc = _device_info()

    # --- VMEM accounting (resident weights + lane/sublane padded biases are
    # --- single-buffered; activation in/out blocks are double-buffered) -----
    weight_vmem = sum(_round_up(w.shape[0], 8) * _round_up(w.shape[1], 128) * wbytes
                      for w in wms)
    if feature_lanes:
        bias_vmem = sum(8 * _round_up(w.shape[0], 128) * 4 for w in wms)
    else:
        bias_vmem = sum(_round_up(w.shape[0], 8) * 128 * 4 for w in wms)
    per_col = 2 * (input_dim * in_itemsize + out_dim * out_itemsize)   # dbl-buffered I/O
    per_col += 4 * max(w.shape[0] for w in wms)                        # hidden-act spill slack
    budget = int(vmem_cap * 0.6)
    max_cols = max(128, (budget - weight_vmem - bias_vmem) // per_col)

    if tile_n is None:
        tile_n = _choose_tile_n(n, max_cols, num_tc)
    n_pad = _round_up(n, tile_n)
    grid = (n_pad // tile_n,)
    vmem_limit = int(min(vmem_cap, 128 * 1024 * 1024) * 0.9)

    # --- layout-specific plumbing (x is kept in its original dtype) ---------
    if feature_lanes:
        x_in = x2
        if n_pad != n:
            x_in = jnp.pad(x_in, ((0, n_pad - n), (0, 0)))
        x_spec = pl.BlockSpec((tile_n, input_dim), lambda i: (i, 0))
        out_spec = pl.BlockSpec((tile_n, out_dim), lambda i: (i, 0))
        out_shape = jax.ShapeDtypeStruct((n_pad, out_dim), orig_dtype)
        kernel = partial(_made_kernel_feature_lanes, num_layers)
        bs = [jnp.asarray(b, jnp.float32).reshape(1, -1) for b in biases]
    else:
        x_in = x2.T                                          # batch rides the 128 lanes
        if n_pad != n:
            x_in = jnp.pad(x_in, ((0, 0), (0, n_pad - n)))
        x_spec = pl.BlockSpec((input_dim, tile_n), lambda i: (0, i))
        out_spec = pl.BlockSpec((out_dim, tile_n), lambda i: (0, i))
        out_shape = jax.ShapeDtypeStruct((out_dim, n_pad), orig_dtype)
        kernel = partial(_made_kernel_batch_lanes, num_layers)
        bs = [jnp.asarray(b, jnp.float32).reshape(-1, 1) for b in biases]

    flops = 2 * n_pad * sum(int(w.shape[0]) * int(w.shape[1]) for w in wms)
    bytes_accessed = (int(x_in.size) * in_itemsize
                      + n_pad * out_dim * out_itemsize
                      + sum(int(w.size) * wbytes for w in wms)
                      + sum(int(b.size) * 4 for b in bs))

    def _run(use_buffered):
        in_specs = [x_spec]
        operands = [x_in]
        for wm, b in zip(wms, bs):
            in_specs.append(_const_spec(wm.shape, use_buffered))
            in_specs.append(_const_spec(b.shape, use_buffered))
            operands.extend([wm, b])
        return pl.pallas_call(
            kernel,
            out_shape=out_shape,
            grid=grid,
            in_specs=in_specs,
            out_specs=out_spec,
            compiler_params=pltpu.CompilerParams(
                dimension_semantics=("parallel",),
                vmem_limit_bytes=vmem_limit,
            ),
            cost_estimate=pl.CostEstimate(
                flops=flops, transcendentals=0, bytes_accessed=bytes_accessed),
        )(*operands)

    try:
        out_raw = _run(True)                # single-buffered weights/biases
    except Exception:
        out_raw = _run(False)               # fallback: default double-buffering

    if feature_lanes:
        out = out_raw[:n]                   # (n, out_dim), no transpose needed
    else:
        out = out_raw[:, :n].T              # back to (n, out_dim)
    return out.reshape(orig_shape)


# ----------------------------------------------------------------------------
# Pure-JAX reference (mirrors MADE._forward)
# ----------------------------------------------------------------------------
def made_reference(x, weights, biases, masks):
    orig_shape = x.shape
    h = x.reshape(orig_shape[0], -1)
    num_layers = len(weights)
    for l, (w, b, m) in enumerate(zip(weights, biases, masks)):
        h = h @ (w * m).T + b
        if l < num_layers - 1:
            h = jnp.maximum(h, 0.0)
    return h.reshape(orig_shape)


# ----------------------------------------------------------------------------
# Deterministic parameter init (PyTorch nn.Linear-style uniform bounds)
# ----------------------------------------------------------------------------
def init_made_params(dims, key):
    weights, biases = [], []
    for l in range(len(dims) - 1):
        in_d, out_d = dims[l], dims[l + 1]
        key, kw, kb = jax.random.split(key, 3)
        bound = 1.0 / np.sqrt(in_d)
        weights.append(jax.random.uniform(kw, (out_d, in_d), jnp.float32, -bound, bound))
        biases.append(jax.random.uniform(kb, (out_d,), jnp.float32, -bound, bound))
    return weights, biases


if __name__ == "__main__":
    key = jax.random.PRNGKey(0)

    # --- Case 1: toy MADE(input_dim=16, hidden=[32,32,16]), image input (n,1,4,4),
    # --- small feature dims -> batch-on-lanes layout, f32 compute ---------------
    input_dim = 16
    hidden_dims = [32, 32, 16]                 # hidden_dims[-1] must equal input_dim
    dims = [input_dim] + hidden_dims
    n = 256
    key, kx = jax.random.split(key)
    x = jax.random.normal(kx, (n, 1, 4, 4), dtype=jnp.float32)
    key, kp = jax.random.split(key)
    weights, biases = init_made_params(dims, kp)
    masks = [jnp.asarray(m) for m in sample_made_masks(input_dim, dims)[0]]

    y = jax.block_until_ready(made_forward(x, weights, biases, masks))
    y_ref = made_reference(x, weights, biases, masks)
    np.testing.assert_allclose(np.asarray(y), np.asarray(y_ref), rtol=1e-5, atol=1e-5)
    assert y.shape == x.shape and y.dtype == x.dtype

    # --- Case 2: 128-multiple feature dims -> natural lane-dense layout
    # --- (no wrapper transposes / output .T) ------------------------------------
    input_dim2 = 128
    dims2 = [input_dim2, 128, 128]
    n2 = 256
    key, kx2 = jax.random.split(key)
    xv = jax.random.normal(kx2, (n2, input_dim2), dtype=jnp.float32)
    key, kp2 = jax.random.split(key)
    w2, b2 = init_made_params(dims2, kp2)
    m2 = [jnp.asarray(m) for m in sample_made_masks(input_dim2, dims2)[0]]
    y2 = jax.block_until_ready(made_forward(xv, w2, b2, m2))
    y2_ref = made_reference(xv, w2, b2, m2)
    np.testing.assert_allclose(np.asarray(y2), np.asarray(y2_ref), rtol=1e-4, atol=1e-4)

    # --- Case 3: bf16 weight/activation stream (v6e/v7x MXU fast path), f32 acc,
    # --- non-multiple batch exercises the padding path --------------------------
    n3 = 200
    x3 = x[:n3]
    y3 = jax.block_until_ready(
        made_forward(x3, weights, biases, masks, compute_dtype=jnp.bfloat16))
    y3_ref = made_reference(x3, weights, biases, masks)
    np.testing.assert_allclose(np.asarray(y3), np.asarray(y3_ref), rtol=5e-2, atol=5e-2)

    # NOTE: self.mean / self.std heads are unused by forward(); not implemented.
    # TODO(synk): autoregressive sample() (Bernoulli loop over the ordering) left out.
    print("KERNEL_OK")
</pallas_src>

<mosaic_0001>
module attributes {stable_mosaic.version = 11 : i64} {
  func.func @_made_kernel_batch_lanes(%arg0: i32, %arg1: memref<16x256xf32, #tpu.memory_space<vmem>>, %arg2: memref<32x16xf32, #tpu.memory_space<vmem>>, %arg3: memref<32x1xf32, #tpu.memory_space<vmem>>, %arg4: memref<32x32xf32, #tpu.memory_space<vmem>>, %arg5: memref<32x1xf32, #tpu.memory_space<vmem>>, %arg6: memref<16x32xf32, #tpu.memory_space<vmem>>, %arg7: memref<16x1xf32, #tpu.memory_space<vmem>>, %arg8: memref<16x256xf32, #tpu.memory_space<vmem>>) attributes {dimension_semantics = [#tpu.dimension_semantics<parallel>], iteration_bounds = array<i64: 1>, scalar_prefetch = 0 : i64, scratch_operands = 0 : i64, tpu.core_type = #tpu.core_type<tc>, window_params = [{transform_indices = @transform_0, window_bounds = array<i64: 16, 256>}, {pipeline_mode = #tpu.pipeline_mode<synchronous>, transform_indices = @transform_1, window_bounds = array<i64: 32, 16>}, {pipeline_mode = #tpu.pipeline_mode<synchronous>, transform_indices = @transform_2, window_bounds = array<i64: 32, 1>}, {pipeline_mode = #tpu.pipeline_mode<synchronous>, transform_indices = @transform_3, window_bounds = array<i64: 32, 32>}, {pipeline_mode = #tpu.pipeline_mode<synchronous>, transform_indices = @transform_4, window_bounds = array<i64: 32, 1>}, {pipeline_mode = #tpu.pipeline_mode<synchronous>, transform_indices = @transform_5, window_bounds = array<i64: 16, 32>}, {pipeline_mode = #tpu.pipeline_mode<synchronous>, transform_indices = @transform_6, window_bounds = array<i64: 16, 1>}, {transform_indices = @transform_7, window_bounds = array<i64: 16, 256>}]} {
    %c0 = arith.constant 0 : index
    %c0_0 = arith.constant 0 : index
    %0 = vector.load %arg1[%c0, %c0_0] : memref<16x256xf32, #tpu.memory_space<vmem>>, vector<16x256xf32>
    %c0_1 = arith.constant 0 : index
    %c0_2 = arith.constant 0 : index
    %1 = vector.load %arg2[%c0_1, %c0_2] : memref<32x16xf32, #tpu.memory_space<vmem>>, vector<32x16xf32>
    %cst = arith.constant dense<0.000000e+00> : vector<32x256xf32>
    %2 = tpu.matmul %1, %0, %cst {dimension_numbers = #tpu.dot_dimension_numbers<[1], [0], [0], [1], [0, 0, 1, 1], [], []>} : vector<32x16xf32>, vector<16x256xf32>, vector<32x256xf32> -> vector<32x256xf32>
    %c0_3 = arith.constant 0 : index
    %c0_4 = arith.constant 0 : index
    %3 = vector.load %arg3[%c0_3, %c0_4] : memref<32x1xf32, #tpu.memory_space<vmem>>, vector<32x1xf32>
    %4 = vector.broadcast %3 : vector<32x1xf32> to vector<32x256xf32>
    %5 = arith.addf %2, %4 : vector<32x256xf32>
    %cst_5 = arith.constant 0.000000e+00 : f32
    %6 = vector.broadcast %cst_5 : f32 to vector<32x256xf32>
    %7 = arith.maximumf %5, %6 : vector<32x256xf32>
    %c0_6 = arith.constant 0 : index
    %c0_7 = arith.constant 0 : index
    %8 = vector.load %arg4[%c0_6, %c0_7] : memref<32x32xf32, #tpu.memory_space<vmem>>, vector<32x32xf32>
    %cst_8 = arith.constant dense<0.000000e+00> : vector<32x256xf32>
    %9 = tpu.matmul %8, %7, %cst_8 {dimension_numbers = #tpu.dot_dimension_numbers<[1], [0], [0], [1], [0, 0, 1, 1], [], []>} : vector<32x32xf32>, vector<32x256xf32>, vector<32x256xf32> -> vector<32x256xf32>
    %c0_9 = arith.constant 0 : index
    %c0_10 = arith.constant 0 : index
    %10 = vector.load %arg5[%c0_9, %c0_10] : memref<32x1xf32, #tpu.memory_space<vmem>>, vector<32x1xf32>
    %11 = vector.broadcast %10 : vector<32x1xf32> to vector<32x256xf32>
    %12 = arith.addf %9, %11 : vector<32x256xf32>
    %cst_11 = arith.constant 0.000000e+00 : f32
    %13 = vector.broadcast %cst_11 : f32 to vector<32x256xf32>
    %14 = arith.maximumf %12, %13 : vector<32x256xf32>
    %c0_12 = arith.constant 0 : index
    %c0_13 = arith.constant 0 : index
    %15 = vector.load %arg6[%c0_12, %c0_13] : memref<16x32xf32, #tpu.memory_space<vmem>>, vector<16x32xf32>
    %cst_14 = arith.constant dense<0.000000e+00> : vector<16x256xf32>
    %16 = tpu.matmul %15, %14, %cst_14 {dimension_numbers = #tpu.dot_dimension_numbers<[1], [0], [0], [1], [0, 0, 1, 1], [], []>} : vector<16x32xf32>, vector<32x256xf32>, vector<16x256xf32> -> vector<16x256xf32>
    %c0_15 = arith.constant 0 : index
    %c0_16 = arith.constant 0 : index
    %17 = vector.load %arg7[%c0_15, %c0_16] : memref<16x1xf32, #tpu.memory_space<vmem>>, vector<16x1xf32>
    %18 = vector.broadcast %17 : vector<16x1xf32> to vector<16x256xf32>
    %19 = arith.addf %16, %18 : vector<16x256xf32>
    %c0_17 = arith.constant 0 : index
    %c0_18 = arith.constant 0 : index
    %20 = vector.load %arg8[%c0_17, %c0_18] : memref<16x256xf32, #tpu.memory_space<vmem>>, vector<16x256xf32>
    tpu.vector_store %arg8[%c0_17, %c0_18], %19 {strides = array<i32>} : memref<16x256xf32, #tpu.memory_space<vmem>>, vector<16x256xf32>,
    return
  }
  func.func @transform_0(%arg0: i32) -> (i32, i32) {
    %c0_i32 = arith.constant 0 : i32
    %c0_i32_0 = arith.constant 0 : i32
    return %c0_i32, %arg0 : i32, i32
  }
  func.func @transform_1(%arg0: i32) -> (i32, i32) {
    %c0_i32 = arith.constant 0 : i32
    %c0_i32_0 = arith.constant 0 : i32
    %c0_i32_1 = arith.constant 0 : i32
    return %c0_i32, %c0_i32_0 : i32, i32
  }
  func.func @transform_2(%arg0: i32) -> (i32, i32) {
    %c0_i32 = arith.constant 0 : i32
    %c0_i32_0 = arith.constant 0 : i32
    %c0_i32_1 = arith.constant 0 : i32
    return %c0_i32, %c0_i32_0 : i32, i32
  }
  func.func @transform_3(%arg0: i32) -> (i32, i32) {
    %c0_i32 = arith.constant 0 : i32
    %c0_i32_0 = arith.constant 0 : i32
    %c0_i32_1 = arith.constant 0 : i32
    return %c0_i32, %c0_i32_0 : i32, i32
  }
  func.func @transform_4(%arg0: i32) -> (i32, i32) {
    %c0_i32 = arith.constant 0 : i32
    %c0_i32_0 = arith.constant 0 : i32
    %c0_i32_1 = arith.constant 0 : i32
    return %c0_i32, %c0_i32_0 : i32, i32
  }
  func.func @transform_5(%arg0: i32) -> (i32, i32) {
    %c0_i32 = arith.constant 0 : i32
    %c0_i32_0 = arith.constant 0 : i32
    %c0_i32_1 = arith.constant 0 : i32
    return %c0_i32, %c0_i32_0 : i32, i32
  }
  func.func @transform_6(%arg0: i32) -> (i32, i32) {
    %c0_i32 = arith.constant 0 : i32
    %c0_i32_0 = arith.constant 0 : i32
    %c0_i32_1 = arith.constant 0 : i32
    return %c0_i32, %c0_i32_0 : i32, i32
  }
  func.func @transform_7(%arg0: i32) -> (i32, i32) {
    %c0_i32 = arith.constant 0 : i32
    %c0_i32_0 = arith.constant 0 : i32
    return %c0_i32, %arg0 : i32, i32
  }
}

module attributes {stable_mosaic.version = 11 : i64} {
  func.func @_made_kernel_batch_lanes(%arg0: i32, %arg1: memref<16x256xf32, #tpu.memory_space<vmem>>, %arg2: memref<32x16xf32, #tpu.memory_space<vmem>>, %arg3: memref<32x1xf32, #tpu.memory_space<vmem>>, %arg4: memref<32x32xf32, #tpu.memory_space<vmem>>, %arg5: memref<32x1xf32, #tpu.memory_space<vmem>>, %arg6: memref<16x32xf32, #tpu.memory_space<vmem>>, %arg7: memref<16x1xf32, #tpu.memory_space<vmem>>, %arg8: memref<16x256xf32, #tpu.memory_space<vmem>>) attributes {dimension_semantics = [#tpu.dimension_semantics<parallel>], iteration_bounds = array<i64: 1>, scalar_prefetch = 0 : i64, scratch_operands = 0 : i64, tpu.core_type = #tpu.core_type<tc>, window_params = [{transform_indices = @transform_0, window_bounds = array<i64: 16, 256>}, {pipeline_mode = #tpu.pipeline_mode<synchronous>, transform_indices = @transform_1, window_bounds = array<i64: 32, 16>}, {pipeline_mode = #tpu.pipeline_mode<synchronous>, transform_indices = @transform_2, window_bounds = array<i64: 32, 1>}, {pipeline_mode = #tpu.pipeline_mode<synchronous>, transform_indices = @transform_3, window_bounds = array<i64: 32, 32>}, {pipeline_mode = #tpu.pipeline_mode<synchronous>, transform_indices = @transform_4, window_bounds = array<i64: 32, 1>}, {pipeline_mode = #tpu.pipeline_mode<synchronous>, transform_indices = @transform_5, window_bounds = array<i64: 16, 32>}, {pipeline_mode = #tpu.pipeline_mode<synchronous>, transform_indices = @transform_6, window_bounds = array<i64: 16, 1>}, {transform_indices = @transform_7, window_bounds = array<i64: 16, 256>}]} {
    %c0 = arith.constant 0 : index
    %c0_0 = arith.constant 0 : index
    %0 = vector.load %arg1[%c0, %c0_0] : memref<16x256xf32, #tpu.memory_space<vmem>>, vector<16x256xf32>
    %c0_1 = arith.constant 0 : index
    %c0_2 = arith.constant 0 : index
    %1 = vector.load %arg2[%c0_1, %c0_2] : memref<32x16xf32, #tpu.memory_space<vmem>>, vector<32x16xf32>
    %cst = arith.constant dense<0.000000e+00> : vector<32x256xf32>
    %2 = tpu.matmul %1, %0, %cst {dimension_numbers = #tpu.dot_dimension_numbers<[1], [0], [0], [1], [0, 0, 1, 1], [], []>} : vector<32x16xf32>, vector<16x256xf32>, vector<32x256xf32> -> vector<32x256xf32>
    %c0_3 = arith.constant 0 : index
    %c0_4 = arith.constant 0 : index
    %3 = vector.load %arg3[%c0_3, %c0_4] : memref<32x1xf32, #tpu.memory_space<vmem>>, vector<32x1xf32>
    %4 = vector.broadcast %3 : vector<32x1xf32> to vector<32x256xf32>
    %5 = arith.addf %2, %4 : vector<32x256xf32>
    %cst_5 = arith.constant 0.000000e+00 : f32
    %6 = vector.broadcast %cst_5 : f32 to vector<32x256xf32>
    %7 = arith.maximumf %5, %6 : vector<32x256xf32>
    %c0_6 = arith.constant 0 : index
    %c0_7 = arith.constant 0 : index
    %8 = vector.load %arg4[%c0_6, %c0_7] : memref<32x32xf32, #tpu.memory_space<vmem>>, vector<32x32xf32>
    %cst_8 = arith.constant dense<0.000000e+00> : vector<32x256xf32>
    %9 = tpu.matmul %8, %7, %cst_8 {dimension_numbers = #tpu.dot_dimension_numbers<[1], [0], [0], [1], [0, 0, 1, 1], [], []>} : vector<32x32xf32>, vector<32x256xf32>, vector<32x256xf32> -> vector<32x256xf32>
    %c0_9 = arith.constant 0 : index
    %c0_10 = arith.constant 0 : index
    %10 = vector.load %arg5[%c0_9, %c0_10] : memref<32x1xf32, #tpu.memory_space<vmem>>, vector<32x1xf32>
    %11 = vector.broadcast %10 : vector<32x1xf32> to vector<32x256xf32>
    %12 = arith.addf %9, %11 : vector<32x256xf32>
    %cst_11 = arith.constant 0.000000e+00 : f32
    %13 = vector.broadcast %cst_11 : f32 to vector<32x256xf32>
    %14 = arith.maximumf %12, %13 : vector<32x256xf32>
    %c0_12 = arith.constant 0 : index
    %c0_13 = arith.constant 0 : index
    %15 = vector.load %arg6[%c0_12, %c0_13] : memref<16x32xf32, #tpu.memory_space<vmem>>, vector<16x32xf32>
    %cst_14 = arith.constant dense<0.000000e+00> : vector<16x256xf32>
    %16 = tpu.matmul %15, %14, %cst_14 {dimension_numbers = #tpu.dot_dimension_numbers<[1], [0], [0], [1], [0, 0, 1, 1], [], []>} : vector<16x32xf32>, vector<32x256xf32>, vector<16x256xf32> -> vector<16x256xf32>
    %c0_15 = arith.constant 0 : index
    %c0_16 = arith.constant 0 : index
    %17 = vector.load %arg7[%c0_15, %c0_16] : memref<16x1xf32, #tpu.memory_space<vmem>>, vector<16x1xf32>
    %18 = vector.broadcast %17 : vector<16x1xf32> to vector<16x256xf32>
    %19 = arith.addf %16, %18 : vector<16x256xf32>
    %c0_17 = arith.constant 0 : index
    %c0_18 = arith.constant 0 : index
    %20 = vector.load %arg8[%c0_17, %c0_18] : memref<16x256xf32, #tpu.memory_space<vmem>>, vector<16x256xf32>
    tpu.vector_store %arg8[%c0_17, %c0_18], %19 {strides = array<i32>} : memref<16x256xf32, #tpu.memory_space<vmem>>, vector<16x256xf32>,
    return
  }
  func.func @transform_0(%arg0: i32) -> (i32, i32) {
    %c0_i32 = arith.constant 0 : i32
    %c0_i32_0 = arith.constant 0 : i32
    return %c0_i32, %arg0 : i32, i32
  }
  func.func @transform_1(%arg0: i32) -> (i32, i32) {
    %c0_i32 = arith.constant 0 : i32
    %c0_i32_0 = arith.constant 0 : i32
    %c0_i32_1 = arith.constant 0 : i32
    return %c0_i32, %c0_i32_0 : i32, i32
  }
  func.func @transform_2(%arg0: i32) -> (i32, i32) {
    %c0_i32 = arith.constant 0 : i32
    %c0_i32_0 = arith.constant 0 : i32
    %c0_i32_1 = arith.constant 0 : i32
    return %c0_i32, %c0_i32_0 : i32, i32
  }
  func.func @transform_3(%arg0: i32) -> (i32, i32) {
    %c0_i32 = arith.constant 0 : i32
    %c0_i32_0 = arith.constant 0 : i32
    %c0_i32_1 = arith.constant 0 : i32
    return %c0_i32, %c0_i32_0 : i32, i32
  }
  func.func @transform_4(%arg0: i32) -> (i32, i32) {
    %c0_i32 = arith.constant 0 : i32
    %c0_i32_0 = arith.constant 0 : i32
    %c0_i32_1 = arith.constant 0 : i32
    return %c0_i32, %c0_i32_0 : i32, i32
  }
  func.func @transform_5(%arg0: i32) -> (i32, i32) {
    %c0_i32 = arith.constant 0 : i32
    %c0_i32_0 = arith.constant 0 : i32
    %c0_i32_1 = arith.constant 0 : i32
    return %c0_i32, %c0_i32_0 : i32, i32
  }
  func.func @transform_6(%arg0: i32) -> (i32, i32) {
    %c0_i32 = arith.constant 0 : i32
    %c0_i32_0 = arith.constant 0 : i32
    %c0_i32_1 = arith.constant 0 : i32
    return %c0_i32, %c0_i32_0 : i32, i32
  }
  func.func @transform_7(%arg0: i32) -> (i32, i32) {
    %c0_i32 = arith.constant 0 : i32
    %c0_i32_0 = arith.constant 0 : i32
    return %c0_i32, %arg0 : i32, i32
  }
}

</mosaic_0001>

<llo_original>
// kernel: tpu_custom_call.1
$region0: #{tpu_custom_call.1}
  #allocation0 [shape = 'u32[]', space=smem, size = 0x4, offset = 0x4, fixed_abs, tag = 'smem constant byte address 0x4 - core index']
  #allocation1 [shape = 'u32[144,128]{1,0:T(1,128)}', space=vmem, size = 0x12000, scoped, tag = 'internal scratch']
  %s0 = inlined_call_operand.vmem [shape: f32[16,256], index: 0, kind: input, shape index: {}]
  %s1 = inlined_call_operand.vmem [shape: f32[32,16], index: 1, kind: input, shape index: {}]
  %s2 = inlined_call_operand.vmem [shape: f32[32,1], index: 2, kind: input, shape index: {}]
  %s3 = inlined_call_operand.vmem [shape: f32[32,32], index: 3, kind: input, shape index: {}]
  %s4 = inlined_call_operand.vmem [shape: f32[32,1], index: 4, kind: input, shape index: {}]
  %s5 = inlined_call_operand.vmem [shape: f32[16,32], index: 5, kind: input, shape index: {}]
  %s6 = inlined_call_operand.vmem [shape: f32[16,1], index: 6, kind: input, shape index: {}]
  %s7 = inlined_call_operand.hbm [shape: f32[16,256], index: 7, kind: output, shape index: {}]
  %s8 = sld [smem:[#allocation0]]
  $region38: #{tpu_custom_call.1} parent=0
    _
  %s10 = ssub.s32 1, %s8
  %s11 = scalar_select 0, %s10, %s8
  $region1: #{tpu_custom_call.1} parent=0
    #allocation2 [shape = 'u8[16384]{0}', space=vmem, size = 0x4000, scoped, tag = 'output window, operand 0, single buffered']
    #allocation3 [shape = 's32[1]{0}', space=sflag, size = 0x4, scoped, tag = 'scoped memory for tpu_custom_call.1']
    %12 = vsyncpa [#allocation3], 0
    // Predicated region
    $region2: #{tpu_custom_call.1} parent=1 // pred_check
      _
    $region3: #{tpu_custom_call.1} parent=1 // pred_check_branch
      %14 = sbr.rel (0) target = $region5
    $region4: #{tpu_custom_call.1} parent=1 // pred_region
      _
    $region5: #{tpu_custom_call.1} parent=1 // pred_fallthru
      _
    // Predicated region
    $region6: #{tpu_custom_call.1} parent=1 // pred_check
      _
    $region7: #{tpu_custom_call.1} parent=1 // pred_check_branch
      %16 = sbr.rel (0) target = $region9
    $region8: #{tpu_custom_call.1} parent=1 // pred_region
      _
    $region9: #{tpu_custom_call.1} parent=1 // pred_fallthru
      _
    // Predicated region
    $region10: #{tpu_custom_call.1} parent=1 // pred_check
      _
    $region11: #{tpu_custom_call.1} parent=1 // pred_check_branch
      %18 = sbr.rel (0) target = $region13
    $region12: #{tpu_custom_call.1} parent=1 // pred_region
      _
    $region13: #{tpu_custom_call.1} parent=1 // pred_fallthru
      _
    // Predicated region
    $region14: #{tpu_custom_call.1} parent=1 // pred_check
      _
    $region15: #{tpu_custom_call.1} parent=1 // pred_check_branch
      %20 = sbr.rel (0) target = $region17
    $region16: #{tpu_custom_call.1} parent=1 // pred_region
      _
    $region17: #{tpu_custom_call.1} parent=1 // pred_fallthru
      _
    // Predicated region
    $region18: #{tpu_custom_call.1} parent=1 // pred_check
      _
    $region19: #{tpu_custom_call.1} parent=1 // pred_check_branch
      %22 = sbr.rel (0) target = $region21
    $region20: #{tpu_custom_call.1} parent=1 // pred_region
      _
    $region21: #{tpu_custom_call.1} parent=1 // pred_fallthru
      _
    // Predicated region
    $region22: #{tpu_custom_call.1} parent=1 // pred_check
      _
    $region23: #{tpu_custom_call.1} parent=1 // pred_check_branch
      %24 = sbr.rel (0) target = $region25
    $region24: #{tpu_custom_call.1} parent=1 // pred_region
      _
    $region25: #{tpu_custom_call.1} parent=1 // pred_fallthru
      _
    // Predicated region
    $region26: #{tpu_custom_call.1} parent=1 // pred_check
      _
    $region27: #{tpu_custom_call.1} parent=1 // pred_check_branch
      %26 = sbr.rel (0) target = $region29
    $region28: #{tpu_custom_call.1} parent=1 // pred_region
      _
    $region29: #{tpu_custom_call.1} parent=1 // pred_fallthru
      _
    %v27 = vld [vmem:[%s0] sm:$0xff]
    %v28 = vld [vmem:[%s0 + $0x8] sm:$0xff]
    %v29 = vld [vmem:[%s0 + $0x10] sm:$0xff]
    %v30 = vld [vmem:[%s0 + $0x18] sm:$0xff]
    %v31 = vld [vmem:[%s1] sm:$0xff]
    %v32 = vld [vmem:[%s1 + $0x8] sm:$0xff]
    %v33 = vld [vmem:[%s1 + $0x10] sm:$0xff]
    %v34 = vld [vmem:[%s1 + $0x18] sm:$0xff]
    %v35 = vld [vmem:[%s2] sm:$0xff]
    %v36 = vld [vmem:[%s2 + $0x8] sm:$0xff]
    %v37 = vld [vmem:[%s2 + $0x10] sm:$0xff]
    %v38 = vld [vmem:[%s2 + $0x18] sm:$0xff]
    %40 = vset.pattern.permute.xlu0 0
    %41 = vperm.xlu0 %40, %v35
    %v42 = vpop.permute.xlu0 %41
    %45 = vset.pattern.permute.xlu0 0
    %46 = vperm.xlu0 %45, %v36
    %v47 = vpop.permute.xlu0 %46
    %50 = vset.pattern.permute.xlu0 0
    %51 = vperm.xlu0 %50, %v37
    %v52 = vpop.permute.xlu0 %51
    %55 = vset.pattern.permute.xlu0 0
    %56 = vperm.xlu0 %55, %v38
    %v57 = vpop.permute.xlu0 %56
    %vm59 = vcmask 130048
    %v61 = vsel %vm59, %v31, 0
    %v64 = vsel %vm59, %v32, 0
    %v67 = vsel %vm59, %v33, 0
    %v70 = vsel %vm59, %v34, 0
    %72 = vmatprep.subr.mxu0 %v28
    %73 = vmatpush1.msra.mxu0 %v27
    %74 = vmatprep.subr.mxu0 %v30
    %75 = vmatpush1.msra.mxu0 %v29
    %76 = vmatprep.subr.mxu0 0.0
    %77 = vmatpush1.msra.mxu0 0.0
    %78 = vmatprep.subr.mxu0 0.0
    %79 = vmatpush1.msra.mxu0 0.0
    %80 = vmatprep.subr.mxu0 0.0
    %81 = vmatpush1.msra.mxu0 0.0
    %82 = vmatprep.subr.mxu0 0.0
    %83 = vmatpush1.msra.mxu0 0.0
    %84 = vmatprep.subr.mxu0 0.0
    %85 = vmatpush1.msra.mxu0 0.0
    %86 = vmatprep.subr.mxu0 0.0
    %87 = vmatpush1.msra.mxu0 0.0
    %88 = vmatprep.subr.mxu0 0.0
    %89 = vmatpush1.msra.mxu0 0.0
    %90 = vmatprep.subr.mxu0 0.0
    %91 = vmatpush1.msra.mxu0 0.0
    %92 = vmatprep.subr.mxu0 0.0
    %93 = vmatpush1.msra.mxu0 0.0
    %94 = vmatprep.subr.mxu0 0.0
    %95 = vmatpush1.msra.mxu0 0.0
    %96 = vmatprep.subr.mxu0 0.0
    %97 = vmatpush1.msra.mxu0 0.0
    %98 = vmatprep.subr.mxu0 0.0
    %99 = vmatpush1.msra.mxu0 0.0
    %100 = vmatprep.subr.mxu0 0.0
    %101 = vmatpush1.msra.mxu0 0.0
    %102 = vmatprep.subr.mxu0 0.0
    %103 = vmatpush1.msra.mxu0 0.0
    %104 = vmatprep.subr.mxu0 0.0
    %105 = vmatpush1.msra.mxu0 0.0
    %106 = vmatprep.subr.mxu0 0.0
    %107 = vmatpush1.msra.mxu0 0.0
    %108 = vmatprep.subr.mxu0 0.0
    %109 = vmatpush1.msra.mxu0 0.0
    %110 = vmatprep.subr.mxu0 0.0
    %111 = vmatpush1.msra.mxu0 0.0
    %112 = vmatprep.subr.mxu0 0.0
    %113 = vmatpush1.msra.mxu0 0.0
    %114 = vmatprep.subr.mxu0 0.0
    %115 = vmatpush1.msra.mxu0 0.0
    %116 = vmatprep.subr.mxu0 0.0
    %117 = vmatpush1.msra.mxu0 0.0
    %118 = vmatprep.subr.mxu0 0.0
    %119 = vmatpush1.msra.mxu0 0.0
    %120 = vmatprep.subr.mxu0 0.0
    %121 = vmatpush1.msra.mxu0 0.0
    %122 = vmatprep.subr.mxu0 0.0
    %123 = vmatpush1.msra.mxu0 0.0
    %124 = vmatprep.subr.mxu0 0.0
    %125 = vmatpush1.msra.mxu0 0.0
    %126 = vmatprep.subr.mxu0 0.0
    %127 = vmatpush1.msra.mxu0 0.0
    %128 = vmatprep.subr.mxu0 0.0
    %129 = vmatpush1.msra.mxu0 0.0
    %130 = vmatprep.subr.mxu0 0.0
    %131 = vmatpush1.msra.mxu0 0.0
    %132 = vmatprep.subr.mxu0 0.0
    %133 = vmatpush1.msra.mxu0 0.0
    %134 = vmatprep.subr.mxu0 0.0
    %135 = vmatpush1.msra.mxu0 0.0
    %136 = vmatprep.mubr.f32.mxu0 0.0
    %137 = vmatmul.mubr.f32.gmra.mrb[0].mxu0 %v61
    %v138 = vpop.f32.mrb[0].mxu0
    %v139 = vadd.f32 %v42, %v138
    %v140 = vpop.f32.mrb[0].mxu0
    %v141 = vadd.f32 %v42, %v140
    %142 = vmatprep.mubr.f32.mxu0 0.0
    %143 = vmatmul.mubr.f32.gmra.mrb[0].mxu0 %v64
    %v144 = vpop.f32.mrb[0].mxu0
    %v145 = vadd.f32 %v47, %v144
    %v146 = vpop.f32.mrb[0].mxu0
    %v147 = vadd.f32 %v47, %v146
    %148 = vmatprep.mubr.f32.mxu0 0.0
    %149 = vmatmul.mubr.f32.gmra.mrb[0].mxu0 %v67
    %v150 = vpop.f32.mrb[0].mxu0
    %v151 = vadd.f32 %v52, %v150
    %v152 = vpop.f32.mrb[0].mxu0
    %v153 = vadd.f32 %v52, %v152
    %154 = vmatprep.mubr.f32.mxu0 0.0
    %155 = vmatmul.mubr.f32.gmra.mrb[0].mxu0 %v70
    %v156 = vpop.f32.mrb[0].mxu0
    %v157 = vadd.f32 %v57, %v156
    %v158 = vpop.f32.mrb[0].mxu0
    %v159 = vadd.f32 %v57, %v158
    %160 = vdwg.mxu0
    %v161 = vmax.f32 %v139, 0.0
    %v162 = vmax.f32 %v141, 0.0
    %v163 = vmax.f32 %v145, 0.0
    %v164 = vmax.f32 %v147, 0.0
    %v165 = vmax.f32 %v151, 0.0
    %v166 = vmax.f32 %v153, 0.0
    %v167 = vmax.f32 %v157, 0.0
    %v168 = vmax.f32 %v159, 0.0
    %v169 = vld [vmem:[%s3] sm:$0xff]
    %v170 = vld [vmem:[%s3 + $0x8] sm:$0xff]
    %v171 = vld [vmem:[%s3 + $0x10] sm:$0xff]
    %v172 = vld [vmem:[%s3 + $0x18] sm:$0xff]
    %v173 = vld [vmem:[%s4] sm:$0xff]
    %v174 = vld [vmem:[%s4 + $0x8] sm:$0xff]
    %v175 = vld [vmem:[%s4 + $0x10] sm:$0xff]
    %v176 = vld [vmem:[%s4 + $0x18] sm:$0xff]
    %178 = vset.pattern.permute.xlu0 0
    %179 = vperm.xlu0 %178, %v173
    %v180 = vpop.permute.xlu0 %179
    %183 = vset.pattern.permute.xlu0 0
    %184 = vperm.xlu0 %183, %v174
    %v185 = vpop.permute.xlu0 %184
    %188 = vset.pattern.permute.xlu0 0
    %189 = vperm.xlu0 %188, %v175
    %v190 = vpop.permute.xlu0 %189
    %193 = vset.pattern.permute.xlu0 0
    %194 = vperm.xlu0 %193, %v176
    %v195 = vpop.permute.xlu0 %194
    %vm197 = vcmask 261120
    %v199 = vsel %vm197, %v169, 0
    %v202 = vsel %vm197, %v170, 0
    %v205 = vsel %vm197, %v171, 0
    %v208 = vsel %vm197, %v172, 0
    %210 = vmatprep.subr.mxu0 %v162
    %211 = vmatpush1.msra.mxu0 %v161
    %212 = vmatprep.subr.mxu0 %v164
    %213 = vmatpush1.msra.mxu0 %v163
    %214 = vmatprep.subr.mxu0 %v166
    %215 = vmatpush1.msra.mxu0 %v165
    %216 = vmatprep.subr.mxu0 %v168
    %217 = vmatpush1.msra.mxu0 %v167
    %218 = vmatprep.subr.mxu0 0.0
    %219 = vmatpush1.msra.mxu0 0.0
    %220 = vmatprep.subr.mxu0 0.0
    %221 = vmatpush1.msra.mxu0 0.0
    %222 = vmatprep.subr.mxu0 0.0
    %223 = vmatpush1.msra.mxu0 0.0
    %224 = vmatprep.subr.mxu0 0.0
    %225 = vmatpush1.msra.mxu0 0.0
    %226 = vmatprep.subr.mxu0 0.0
    %227 = vmatpush1.msra.mxu0 0.0
    %228 = vmatprep.subr.mxu0 0.0
    %229 = vmatpush1.msra.mxu0 0.0
    %230 = vmatprep.subr.mxu0 0.0
    %231 = vmatpush1.msra.mxu0 0.0
    %232 = vmatprep.subr.mxu0 0.0
    %233 = vmatpush1.msra.mxu0 0.0
    %234 = vmatprep.subr.mxu0 0.0
    %235 = vmatpush1.msra.mxu0 0.0
    %236 = vmatprep.subr.mxu0 0.0
    %237 = vmatpush1.msra.mxu0 0.0
    %238 = vmatprep.subr.mxu0 0.0
    %239 = vmatpush1.msra.mxu0 0.0
    %240 = vmatprep.subr.mxu0 0.0
    %241 = vmatpush1.msra.mxu0 0.0
    %242 = vmatprep.subr.mxu0 0.0
    %243 = vmatpush1.msra.mxu0 0.0
    %244 = vmatprep.subr.mxu0 0.0
    %245 = vmatpush1.msra.mxu0 0.0
    %246 = vmatprep.subr.mxu0 0.0
    %247 = vmatpush1.msra.mxu0 0.0
    %248 = vmatprep.subr.mxu0 0.0
    %249 = vmatpush1.msra.mxu0 0.0
    %250 = vmatprep.subr.mxu0 0.0
    %251 = vmatpush1.msra.mxu0 0.0
    %252 = vmatprep.subr.mxu0 0.0
    %253 = vmatpush1.msra.mxu0 0.0
    %254 = vmatprep.subr.mxu0 0.0
    %255 = vmatpush1.msra.mxu0 0.0
    %256 = vmatprep.subr.mxu0 0.0
    %257 = vmatpush1.msra.mxu0 0.0
    %258 = vmatprep.subr.mxu0 0.0
    %259 = vmatpush1.msra.mxu0 0.0
    %260 = vmatprep.subr.mxu0 0.0
    %261 = vmatpush1.msra.mxu0 0.0
    %262 = vmatprep.subr.mxu0 0.0
    %263 = vmatpush1.msra.mxu0 0.0
    %264 = vmatprep.subr.mxu0 0.0
    %265 = vmatpush1.msra.mxu0 0.0
    %266 = vmatprep.subr.mxu0 0.0
    %267 = vmatpush1.msra.mxu0 0.0
    %268 = vmatprep.subr.mxu0 0.0
    %269 = vmatpush1.msra.mxu0 0.0
    %270 = vmatprep.subr.mxu0 0.0
    %271 = vmatpush1.msra.mxu0 0.0
    %272 = vmatprep.subr.mxu0 0.0
    %273 = vmatpush1.msra.mxu0 0.0
    %274 = vmatprep.mubr.f32.mxu0 0.0
    %275 = vmatmul.mubr.f32.gmra.mrb[0].mxu0 %v199
    %v276 = vpop.f32.mrb[0].mxu0
    %v277 = vadd.f32 %v180, %v276
    %v278 = vpop.f32.mrb[0].mxu0
    %v279 = vadd.f32 %v180, %v278
    %280 = vmatprep.mubr.f32.mxu0 0.0
    %281 = vmatmul.mubr.f32.gmra.mrb[0].mxu0 %v202
    %v282 = vpop.f32.mrb[0].mxu0
    %v283 = vadd.f32 %v185, %v282
    %v284 = vpop.f32.mrb[0].mxu0
    %v285 = vadd.f32 %v185, %v284
    %286 = vmatprep.mubr.f32.mxu0 0.0
    %287 = vmatmul.mubr.f32.gmra.mrb[0].mxu0 %v205
    %v288 = vpop.f32.mrb[0].mxu0
    %v289 = vadd.f32 %v190, %v288
    %v290 = vpop.f32.mrb[0].mxu0
    %v291 = vadd.f32 %v190, %v290
    %292 = vmatprep.mubr.f32.mxu0 0.0
    %293 = vmatmul.mubr.f32.gmra.mrb[0].mxu0 %v208
    %v294 = vpop.f32.mrb[0].mxu0
    %v295 = vadd.f32 %v195, %v294
    %v296 = vpop.f32.mrb[0].mxu0
    %v297 = vadd.f32 %v195, %v296
    %298 = vdwg.mxu0
    %v299 = vmax.f32 %v277, 0.0
    %v300 = vmax.f32 %v279, 0.0
    %v301 = vmax.f32 %v283, 0.0
    %v302 = vmax.f32 %v285, 0.0
    %v303 = vmax.f32 %v289, 0.0
    %v304 = vmax.f32 %v291, 0.0
    %v305 = vmax.f32 %v295, 0.0
    %v306 = vmax.f32 %v297, 0.0
    %v307 = vld [vmem:[%s5] sm:$0xff]
    %v308 = vld [vmem:[%s5 + $0x8] sm:$0xff]
    %v309 = vld [vmem:[%s6] sm:$0xff]
    %v310 = vld [vmem:[%s6 + $0x8] sm:$0xff]
    %312 = vset.pattern.permute.xlu0 0
    %313 = vperm.xlu0 %312, %v309
    %v314 = vpop.permute.xlu0 %313
    %317 = vset.pattern.permute.xlu0 0
    %318 = vperm.xlu0 %317, %v310
    %v319 = vpop.permute.xlu0 %318
    %v322 = vsel %vm197, %v307, 0
    %v325 = vsel %vm197, %v308, 0
    %327 = vmatprep.subr.mxu0 %v300
    %328 = vmatpush1.msra.mxu0 %v299
    %329 = vmatprep.subr.mxu0 %v302
    %330 = vmatpush1.msra.mxu0 %v301
    %331 = vmatprep.subr.mxu0 %v304
    %332 = vmatpush1.msra.mxu0 %v303
    %333 = vmatprep.subr.mxu0 %v306
    %334 = vmatpush1.msra.mxu0 %v305
    %335 = vmatprep.subr.mxu0 0.0
    %336 = vmatpush1.msra.mxu0 0.0
    %337 = vmatprep.subr.mxu0 0.0
    %338 = vmatpush1.msra.mxu0 0.0
    %339 = vmatprep.subr.mxu0 0.0
    %340 = vmatpush1.msra.mxu0 0.0
    %341 = vmatprep.subr.mxu0 0.0
    %342 = vmatpush1.msra.mxu0 0.0
    %343 = vmatprep.subr.mxu0 0.0
    %344 = vmatpush1.msra.mxu0 0.0
    %345 = vmatprep.subr.mxu0 0.0
    %346 = vmatpush1.msra.mxu0 0.0
    %347 = vmatprep.subr.mxu0 0.0
    %348 = vmatpush1.msra.mxu0 0.0
    %349 = vmatprep.subr.mxu0 0.0
    %350 = vmatpush1.msra.mxu0 0.0
    %351 = vmatprep.subr.mxu0 0.0
    %352 = vmatpush1.msra.mxu0 0.0
    %353 = vmatprep.subr.mxu0 0.0
    %354 = vmatpush1.msra.mxu0 0.0
    %355 = vmatprep.subr.mxu0 0.0
    %356 = vmatpush1.msra.mxu0 0.0
    %357 = vmatprep.subr.mxu0 0.0
    %358 = vmatpush1.msra.mxu0 0.0
    %359 = vmatprep.subr.mxu0 0.0
    %360 = vmatpush1.msra.mxu0 0.0
    %361 = vmatprep.subr.mxu0 0.0
    %362 = vmatpush1.msra.mxu0 0.0
    %363 = vmatprep.subr.mxu0 0.0
    %364 = vmatpush1.msra.mxu0 0.0
    %365 = vmatprep.subr.mxu0 0.0
    %366 = vmatpush1.msra.mxu0 0.0
    %367 = vmatprep.subr.mxu0 0.0
    %368 = vmatpush1.msra.mxu0 0.0
    %369 = vmatprep.subr.mxu0 0.0
    %370 = vmatpush1.msra.mxu0 0.0
    %371 = vmatprep.subr.mxu0 0.0
    %372 = vmatpush1.msra.mxu0 0.0
    %373 = vmatprep.subr.mxu0 0.0
    %374 = vmatpush1.msra.mxu0 0.0
    %375 = vmatprep.subr.mxu0 0.0
    %376 = vmatpush1.msra.mxu0 0.0
    %377 = vmatprep.subr.mxu0 0.0
    %378 = vmatpush1.msra.mxu0 0.0
    %379 = vmatprep.subr.mxu0 0.0
    %380 = vmatpush1.msra.mxu0 0.0
    %381 = vmatprep.subr.mxu0 0.0
    %382 = vmatpush1.msra.mxu0 0.0
    %383 = vmatprep.subr.mxu0 0.0
    %384 = vmatpush1.msra.mxu0 0.0
    %385 = vmatprep.subr.mxu0 0.0
    %386 = vmatpush1.msra.mxu0 0.0
    %387 = vmatprep.subr.mxu0 0.0
    %388 = vmatpush1.msra.mxu0 0.0
    %389 = vmatprep.subr.mxu0 0.0
    %390 = vmatpush1.msra.mxu0 0.0
    %391 = vmatprep.mubr.f32.mxu0 0.0
    %392 = vmatmul.mubr.f32.gmra.mrb[0].mxu0 %v322
    %v393 = vpop.f32.mrb[0].mxu0
    %v394 = vadd.f32 %v314, %v393
    %v395 = vpop.f32.mrb[0].mxu0
    %v396 = vadd.f32 %v314, %v395
    %397 = vmatprep.mubr.f32.mxu0 0.0
    %398 = vmatmul.mubr.f32.gmra.mrb[0].mxu0 %v325
    %v399 = vpop.f32.mrb[0].mxu0
    %v400 = vadd.f32 %v319, %v399
    %v401 = vpop.f32.mrb[0].mxu0
    %v402 = vadd.f32 %v319, %v401
    %403 = vdwg.mxu0
    %404 = vst [vmem:[#allocation2] sm:$0xff] %v394
    %405 = vst [vmem:[#allocation2 + $0x8] sm:$0xff] %v396
    %406 = vst [vmem:[#allocation2 + $0x10] sm:$0xff] %v400
    %407 = vst [vmem:[#allocation2 + $0x18] sm:$0xff] %v402
    // Predicated region
    $region30: #{tpu_custom_call.1} parent=1 // pred_check
      _
    $region31: #{tpu_custom_call.1} parent=1 // pred_check_branch
      %409 = sbr.rel (0) target = $region33
    $region32: #{tpu_custom_call.1} parent=1 // pred_region
      %s411 = ssub.s32 512, 512
      %412 = vsyncadd [#allocation3], %s411
      %s413 = sshll.u32 [#allocation2], 4
      %s414 = int_to_ptr.vmem [resolvable:$true] %s413
      %419 = dma.vmem_to_hbm [thread:$0]  %s414, 512, %s7, [#allocation3], 256, 256, 16
    $region33: #{tpu_custom_call.1} parent=1 // pred_fallthru
      _
    // Predicated region
    $region34: #{tpu_custom_call.1} parent=1 // pred_check
      _
    $region35: #{tpu_custom_call.1} parent=1 // pred_check_branch
      %421 = sbr.rel (0) target = $region37
    $region36: #{tpu_custom_call.1} parent=1 // pred_region
      %422 = dma.done [#allocation3], 512
    $region37: #{tpu_custom_call.1} parent=1 // pred_fallthru
      _
    %423 = vsyncpa [#allocation3], 1

// kernel: tpu_custom_call.1
$region0: #{tpu_custom_call.1}
  #allocation0 [shape = 'u32[]', space=smem, size = 0x4, offset = 0x4, fixed_abs, tag = 'smem constant byte address 0x4 - core index']
  #allocation1 [shape = 'u32[144,128]{1,0:T(1,128)}', space=vmem, size = 0x12000, scoped, tag = 'internal scratch']
  %s0 = inlined_call_operand.vmem [shape: f32[16,256], index: 0, kind: input, shape index: {}]
  %s1 = inlined_call_operand.vmem [shape: f32[32,16], index: 1, kind: input, shape index: {}]
  %s2 = inlined_call_operand.vmem [shape: f32[32,1], index: 2, kind: input, shape index: {}]
  %s3 = inlined_call_operand.vmem [shape: f32[32,32], index: 3, kind: input, shape index: {}]
  %s4 = inlined_call_operand.vmem [shape: f32[32,1], index: 4, kind: input, shape index: {}]
  %s5 = inlined_call_operand.vmem [shape: f32[16,32], index: 5, kind: input, shape index: {}]
  %s6 = inlined_call_operand.vmem [shape: f32[16,1], index: 6, kind: input, shape index: {}]
  %s7 = inlined_call_operand.hbm [shape: f32[16,256], index: 7, kind: output, shape index: {}]
  %s8 = sld [smem:[#allocation0]]
  $region38: #{tpu_custom_call.1} parent=0
    _
  %s10 = ssub.s32 1, %s8
  %s11 = scalar_select 0, %s10, %s8
  $region1: #{tpu_custom_call.1} parent=0
    #allocation2 [shape = 'u8[16384]{0}', space=vmem, size = 0x4000, scoped, tag = 'output window, operand 0, single buffered']
    #allocation3 [shape = 's32[1]{0}', space=sflag, size = 0x4, scoped, tag = 'scoped memory for tpu_custom_call.1']
    %12 = vsyncpa [#allocation3], 0
    // Predicated region
    $region2: #{tpu_custom_call.1} parent=1 // pred_check
      _
    $region3: #{tpu_custom_call.1} parent=1 // pred_check_branch
      %14 = sbr.rel (0) target = $region5
    $region4: #{tpu_custom_call.1} parent=1 // pred_region
      _
    $region5: #{tpu_custom_call.1} parent=1 // pred_fallthru
      _
    // Predicated region
    $region6: #{tpu_custom_call.1} parent=1 // pred_check
      _
    $region7: #{tpu_custom_call.1} parent=1 // pred_check_branch
      %16 = sbr.rel (0) target = $region9
    $region8: #{tpu_custom_call.1} parent=1 // pred_region
      _
    $region9: #{tpu_custom_call.1} parent=1 // pred_fallthru
      _
    // Predicated region
    $region10: #{tpu_custom_call.1} parent=1 // pred_check
      _
    $region11: #{tpu_custom_call.1} parent=1 // pred_check_branch
      %18 = sbr.rel (0) target = $region13
    $region12: #{tpu_custom_call.1} parent=1 // pred_region
      _
    $region13: #{tpu_custom_call.1} parent=1 // pred_fallthru
      _
    // Predicated region
    $region14: #{tpu_custom_call.1} parent=1 // pred_check
      _
    $region15: #{tpu_custom_call.1} parent=1 // pred_check_branch
      %20 = sbr.rel (0) target = $region17
    $region16: #{tpu_custom_call.1} parent=1 // pred_region
      _
    $region17: #{tpu_custom_call.1} parent=1 // pred_fallthru
      _
    // Predicated region
    $region18: #{tpu_custom_call.1} parent=1 // pred_check
      _
    $region19: #{tpu_custom_call.1} parent=1 // pred_check_branch
      %22 = sbr.rel (0) target = $region21
    $region20: #{tpu_custom_call.1} parent=1 // pred_region
      _
    $region21: #{tpu_custom_call.1} parent=1 // pred_fallthru
      _
    // Predicated region
    $region22: #{tpu_custom_call.1} parent=1 // pred_check
      _
    $region23: #{tpu_custom_call.1} parent=1 // pred_check_branch
      %24 = sbr.rel (0) target = $region25
    $region24: #{tpu_custom_call.1} parent=1 // pred_region
      _
    $region25: #{tpu_custom_call.1} parent=1 // pred_fallthru
      _
    // Predicated region
    $region26: #{tpu_custom_call.1} parent=1 // pred_check
      _
    $region27: #{tpu_custom_call.1} parent=1 // pred_check_branch
      %26 = sbr.rel (0) target = $region29
    $region28: #{tpu_custom_call.1} parent=1 // pred_region
      _
    $region29: #{tpu_custom_call.1} parent=1 // pred_fallthru
      _
    %v27 = vld [vmem:[%s0] sm:$0xff]
    %v28 = vld [vmem:[%s0 + $0x8] sm:$0xff]
    %v29 = vld [vmem:[%s0 + $0x10] sm:$0xff]
    %v30 = vld [vmem:[%s0 + $0x18] sm:$0xff]
    %v31 = vld [vmem:[%s1] sm:$0xff]
    %v32 = vld [vmem:[%s1 + $0x8] sm:$0xff]
    %v33 = vld [vmem:[%s1 + $0x10] sm:$0xff]
    %v34 = vld [vmem:[%s1 + $0x18] sm:$0xff]
    %v35 = vld [vmem:[%s2] sm:$0xff]
    %v36 = vld [vmem:[%s2 + $0x8] sm:$0xff]
    %v37 = vld [vmem:[%s2 + $0x10] sm:$0xff]
    %v38 = vld [vmem:[%s2 + $0x18] sm:$0xff]
    %40 = vset.pattern.permute.xlu0 0
    %41 = vperm.xlu0 %40, %v35
    %v42 = vpop.permute.xlu0 %41
    %45 = vset.pattern.permute.xlu0 0
    %46 = vperm.xlu0 %45, %v36
    %v47 = vpop.permute.xlu0 %46
    %50 = vset.pattern.permute.xlu0 0
    %51 = vperm.xlu0 %50, %v37
    %v52 = vpop.permute.xlu0 %51
    %55 = vset.pattern.permute.xlu0 0
    %56 = vperm.xlu0 %55, %v38
    %v57 = vpop.permute.xlu0 %56
    %vm59 = vcmask 130048
    %v61 = vsel %vm59, %v31, 0
    %v64 = vsel %vm59, %v32, 0
    %v67 = vsel %vm59, %v33, 0
    %v70 = vsel %vm59, %v34, 0
    %72 = vmatprep.subr.mxu0 %v28
    %73 = vmatpush1.msra.mxu0 %v27
    %74 = vmatprep.subr.mxu0 %v30
    %75 = vmatpush1.msra.mxu0 %v29
    %76 = vmatprep.subr.mxu0 0.0
    %77 = vmatpush1.msra.mxu0 0.0
    %78 = vmatprep.subr.mxu0 0.0
    %79 = vmatpush1.msra.mxu0 0.0
    %80 = vmatprep.subr.mxu0 0.0
    %81 = vmatpush1.msra.mxu0 0.0
    %82 = vmatprep.subr.mxu0 0.0
    %83 = vmatpush1.msra.mxu0 0.0
    %84 = vmatprep.subr.mxu0 0.0
    %85 = vmatpush1.msra.mxu0 0.0
    %86 = vmatprep.subr.mxu0 0.0
    %87 = vmatpush1.msra.mxu0 0.0
    %88 = vmatprep.subr.mxu0 0.0
    %89 = vmatpush1.msra.mxu0 0.0
    %90 = vmatprep.subr.mxu0 0.0
    %91 = vmatpush1.msra.mxu0 0.0
    %92 = vmatprep.subr.mxu0 0.0
    %93 = vmatpush1.msra.mxu0 0.0
    %94 = vmatprep.subr.mxu0 0.0
    %95 = vmatpush1.msra.mxu0 0.0
    %96 = vmatprep.subr.mxu0 0.0
    %97 = vmatpush1.msra.mxu0 0.0
    %98 = vmatprep.subr.mxu0 0.0
    %99 = vmatpush1.msra.mxu0 0.0
    %100 = vmatprep.subr.mxu0 0.0
    %101 = vmatpush1.msra.mxu0 0.0
    %102 = vmatprep.subr.mxu0 0.0
    %103 = vmatpush1.msra.mxu0 0.0
    %104 = vmatprep.subr.mxu0 0.0
    %105 = vmatpush1.msra.mxu0 0.0
    %106 = vmatprep.subr.mxu0 0.0
    %107 = vmatpush1.msra.mxu0 0.0
    %108 = vmatprep.subr.mxu0 0.0
    %109 = vmatpush1.msra.mxu0 0.0
    %110 = vmatprep.subr.mxu0 0.0
    %111 = vmatpush1.msra.mxu0 0.0
    %112 = vmatprep.subr.mxu0 0.0
    %113 = vmatpush1.msra.mxu0 0.0
    %114 = vmatprep.subr.mxu0 0.0
    %115 = vmatpush1.msra.mxu0 0.0
    %116 = vmatprep.subr.mxu0 0.0
    %117 = vmatpush1.msra.mxu0 0.0
    %118 = vmatprep.subr.mxu0 0.0
    %119 = vmatpush1.msra.mxu0 0.0
    %120 = vmatprep.subr.mxu0 0.0
    %121 = vmatpush1.msra.mxu0 0.0
    %122 = vmatprep.subr.mxu0 0.0
    %123 = vmatpush1.msra.mxu0 0.0
    %124 = vmatprep.subr.mxu0 0.0
    %125 = vmatpush1.msra.mxu0 0.0
    %126 = vmatprep.subr.mxu0 0.0
    %127 = vmatpush1.msra.mxu0 0.0
    %128 = vmatprep.subr.mxu0 0.0
    %129 = vmatpush1.msra.mxu0 0.0
    %130 = vmatprep.subr.mxu0 0.0
    %131 = vmatpush1.msra.mxu0 0.0
    %132 = vmatprep.subr.mxu0 0.0
    %133 = vmatpush1.msra.mxu0 0.0
    %134 = vmatprep.subr.mxu0 0.0
    %135 = vmatpush1.msra.mxu0 0.0
    %136 = vmatprep.mubr.f32.mxu0 0.0
    %137 = vmatmul.mubr.f32.gmra.mrb[0].mxu0 %v61
    %v138 = vpop.f32.mrb[0].mxu0
    %v139 = vadd.f32 %v42, %v138
    %v140 = vpop.f32.mrb[0].mxu0
    %v141 = vadd.f32 %v42, %v140
    %142 = vmatprep.mubr.f32.mxu0 0.0
    %143 = vmatmul.mubr.f32.gmra.mrb[0].mxu0 %v64
    %v144 = vpop.f32.mrb[0].mxu0
    %v145 = vadd.f32 %v47, %v144
    %v146 = vpop.f32.mrb[0].mxu0
    %v147 = vadd.f32 %v47, %v146
    %148 = vmatprep.mubr.f32.mxu0 0.0
    %149 = vmatmul.mubr.f32.gmra.mrb[0].mxu0 %v67
    %v150 = vpop.f32.mrb[0].mxu0
    %v151 = vadd.f32 %v52, %v150
    %v152 = vpop.f32.mrb[0].mxu0
    %v153 = vadd.f32 %v52, %v152
    %154 = vmatprep.mubr.f32.mxu0 0.0
    %155 = vmatmul.mubr.f32.gmra.mrb[0].mxu0 %v70
    %v156 = vpop.f32.mrb[0].mxu0
    %v157 = vadd.f32 %v57, %v156
    %v158 = vpop.f32.mrb[0].mxu0
    %v159 = vadd.f32 %v57, %v158
    %160 = vdwg.mxu0
    %v161 = vmax.f32 %v139, 0.0
    %v162 = vmax.f32 %v141, 0.0
    %v163 = vmax.f32 %v145, 0.0
    %v164 = vmax.f32 %v147, 0.0
    %v165 = vmax.f32 %v151, 0.0
    %v166 = vmax.f32 %v153, 0.0
    %v167 = vmax.f32 %v157, 0.0
    %v168 = vmax.f32 %v159, 0.0
    %v169 = vld [vmem:[%s3] sm:$0xff]
    %v170 = vld [vmem:[%s3 + $0x8] sm:$0xff]
    %v171 = vld [vmem:[%s3 + $0x10] sm:$0xff]
    %v172 = vld [vmem:[%s3 + $0x18] sm:$0xff]
    %v173 = vld [vmem:[%s4] sm:$0xff]
    %v174 = vld [vmem:[%s4 + $0x8] sm:$0xff]
    %v175 = vld [vmem:[%s4 + $0x10] sm:$0xff]
    %v176 = vld [vmem:[%s4 + $0x18] sm:$0xff]
    %178 = vset.pattern.permute.xlu0 0
    %179 = vperm.xlu0 %178, %v173
    %v180 = vpop.permute.xlu0 %179
    %183 = vset.pattern.permute.xlu0 0
    %184 = vperm.xlu0 %183, %v174
    %v185 = vpop.permute.xlu0 %184
    %188 = vset.pattern.permute.xlu0 0
    %189 = vperm.xlu0 %188, %v175
    %v190 = vpop.permute.xlu0 %189
    %193 = vset.pattern.permute.xlu0 0
    %194 = vperm.xlu0 %193, %v176
    %v195 = vpop.permute.xlu0 %194
    %vm197 = vcmask 261120
    %v199 = vsel %vm197, %v169, 0
    %v202 = vsel %vm197, %v170, 0
    %v205 = vsel %vm197, %v171, 0
    %v208 = vsel %vm197, %v172, 0
    %210 = vmatprep.subr.mxu0 %v162
    %211 = vmatpush1.msra.mxu0 %v161
    %212 = vmatprep.subr.mxu0 %v164
    %213 = vmatpush1.msra.mxu0 %v163
    %214 = vmatprep.subr.mxu0 %v166
    %215 = vmatpush1.msra.mxu0 %v165
    %216 = vmatprep.subr.mxu0 %v168
    %217 = vmatpush1.msra.mxu0 %v167
    %218 = vmatprep.subr.mxu0 0.0
    %219 = vmatpush1.msra.mxu0 0.0
    %220 = vmatprep.subr.mxu0 0.0
    %221 = vmatpush1.msra.mxu0 0.0
    %222 = vmatprep.subr.mxu0 0.0
    %223 = vmatpush1.msra.mxu0 0.0
    %224 = vmatprep.subr.mxu0 0.0
    %225 = vmatpush1.msra.mxu0 0.0
    %226 = vmatprep.subr.mxu0 0.0
    %227 = vmatpush1.msra.mxu0 0.0
    %228 = vmatprep.subr.mxu0 0.0
    %229 = vmatpush1.msra.mxu0 0.0
    %230 = vmatprep.subr.mxu0 0.0
    %231 = vmatpush1.msra.mxu0 0.0
    %232 = vmatprep.subr.mxu0 0.0
    %233 = vmatpush1.msra.mxu0 0.0
    %234 = vmatprep.subr.mxu0 0.0
    %235 = vmatpush1.msra.mxu0 0.0
    %236 = vmatprep.subr.mxu0 0.0
    %237 = vmatpush1.msra.mxu0 0.0
    %238 = vmatprep.subr.mxu0 0.0
    %239 = vmatpush1.msra.mxu0 0.0
    %240 = vmatprep.subr.mxu0 0.0
    %241 = vmatpush1.msra.mxu0 0.0
    %242 = vmatprep.subr.mxu0 0.0
    %243 = vmatpush1.msra.mxu0 0.0
    %244 = vmatprep.subr.mxu0 0.0
    %245 = vmatpush1.msra.mxu0 0.0
    %246 = vmatprep.subr.mxu0 0.0
    %247 = vmatpush1.msra.mxu0 0.0
    %248 = vmatprep.subr.mxu0 0.0
    %249 = vmatpush1.msra.mxu0 0.0
    %250 = vmatprep.subr.mxu0 0.0
    %251 = vmatpush1.msra.mxu0 0.0
    %252 = vmatprep.subr.mxu0 0.0
    %253 = vmatpush1.msra.mxu0 0.0
    %254 = vmatprep.subr.mxu0 0.0
    %255 = vmatpush1.msra.mxu0 0.0
    %256 = vmatprep.subr.mxu0 0.0
    %257 = vmatpush1.msra.mxu0 0.0
    %258 = vmatprep.subr.mxu0 0.0
    %259 = vmatpush1.msra.mxu0 0.0
    %260 = vmatprep.subr.mxu0 0.0
    %261 = vmatpush1.msra.mxu0 0.0
    %262 = vmatprep.subr.mxu0 0.0
    %263 = vmatpush1.msra.mxu0 0.0
    %264 = vmatprep.subr.mxu0 0.0
    %265 = vmatpush1.msra.mxu0 0.0
    %266 = vmatprep.subr.mxu0 0.0
    %267 = vmatpush1.msra.mxu0 0.0
    %268 = vmatprep.subr.mxu0 0.0
    %269 = vmatpush1.msra.mxu0 0.0
    %270 = vmatprep.subr.mxu0 0.0
    %271 = vmatpush1.msra.mxu0 0.0
    %272 = vmatprep.subr.mxu0 0.0
    %273 = vmatpush1.msra.mxu0 0.0
    %274 = vmatprep.mubr.f32.mxu0 0.0
    %275 = vmatmul.mubr.f32.gmra.mrb[0].mxu0 %v199
    %v276 = vpop.f32.mrb[0].mxu0
    %v277 = vadd.f32 %v180, %v276
    %v278 = vpop.f32.mrb[0].mxu0
    %v279 = vadd.f32 %v180, %v278
    %280 = vmatprep.mubr.f32.mxu0 0.0
    %281 = vmatmul.mubr.f32.gmra.mrb[0].mxu0 %v202
    %v282 = vpop.f32.mrb[0].mxu0
    %v283 = vadd.f32 %v185, %v282
    %v284 = vpop.f32.mrb[0].mxu0
    %v285 = vadd.f32 %v185, %v284
    %286 = vmatprep.mubr.f32.mxu0 0.0
    %287 = vmatmul.mubr.f32.gmra.mrb[0].mxu0 %v205
    %v288 = vpop.f32.mrb[0].mxu0
    %v289 = vadd.f32 %v190, %v288
    %v290 = vpop.f32.mrb[0].mxu0
    %v291 = vadd.f32 %v190, %v290
    %292 = vmatprep.mubr.f32.mxu0 0.0
    %293 = vmatmul.mubr.f32.gmra.mrb[0].mxu0 %v208
    %v294 = vpop.f32.mrb[0].mxu0
    %v295 = vadd.f32 %v195, %v294
    %v296 = vpop.f32.mrb[0].mxu0
    %v297 = vadd.f32 %v195, %v296
    %298 = vdwg.mxu0
    %v299 = vmax.f32 %v277, 0.0
    %v300 = vmax.f32 %v279, 0.0
    %v301 = vmax.f32 %v283, 0.0
    %v302 = vmax.f32 %v285, 0.0
    %v303 = vmax.f32 %v289, 0.0
    %v304 = vmax.f32 %v291, 0.0
    %v305 = vmax.f32 %v295, 0.0
    %v306 = vmax.f32 %v297, 0.0
    %v307 = vld [vmem:[%s5] sm:$0xff]
    %v308 = vld [vmem:[%s5 + $0x8] sm:$0xff]
    %v309 = vld [vmem:[%s6] sm:$0xff]
    %v310 = vld [vmem:[%s6 + $0x8] sm:$0xff]
    %312 = vset.pattern.permute.xlu0 0
    %313 = vperm.xlu0 %312, %v309
    %v314 = vpop.permute.xlu0 %313
    %317 = vset.pattern.permute.xlu0 0
    %318 = vperm.xlu0 %317, %v310
    %v319 = vpop.permute.xlu0 %318
    %v322 = vsel %vm197, %v307, 0
    %v325 = vsel %vm197, %v308, 0
    %327 = vmatprep.subr.mxu0 %v300
    %328 = vmatpush1.msra.mxu0 %v299
    %329 = vmatprep.subr.mxu0 %v302
    %330 = vmatpush1.msra.mxu0 %v301
    %331 = vmatprep.subr.mxu0 %v304
    %332 = vmatpush1.msra.mxu0 %v303
    %333 = vmatprep.subr.mxu0 %v306
    %334 = vmatpush1.msra.mxu0 %v305
    %335 = vmatprep.subr.mxu0 0.0
    %336 = vmatpush1.msra.mxu0 0.0
    %337 = vmatprep.subr.mxu0 0.0
    %338 = vmatpush1.msra.mxu0 0.0
    %339 = vmatprep.subr.mxu0 0.0
    %340 = vmatpush1.msra.mxu0 0.0
    %341 = vmatprep.subr.mxu0 0.0
    %342 = vmatpush1.msra.mxu0 0.0
    %343 = vmatprep.subr.mxu0 0.0
    %344 = vmatpush1.msra.mxu0 0.0
    %345 = vmatprep.subr.mxu0 0.0
    %346 = vmatpush1.msra.mxu0 0.0
    %347 = vmatprep.subr.mxu0 0.0
    %348 = vmatpush1.msra.mxu0 0.0
    %349 = vmatprep.subr.mxu0 0.0
    %350 = vmatpush1.msra.mxu0 0.0
    %351 = vmatprep.subr.mxu0 0.0
    %352 = vmatpush1.msra.mxu0 0.0
    %353 = vmatprep.subr.mxu0 0.0
    %354 = vmatpush1.msra.mxu0 0.0
    %355 = vmatprep.subr.mxu0 0.0
    %356 = vmatpush1.msra.mxu0 0.0
    %357 = vmatprep.subr.mxu0 0.0
    %358 = vmatpush1.msra.mxu0 0.0
    %359 = vmatprep.subr.mxu0 0.0
    %360 = vmatpush1.msra.mxu0 0.0
    %361 = vmatprep.subr.mxu0 0.0
    %362 = vmatpush1.msra.mxu0 0.0
    %363 = vmatprep.subr.mxu0 0.0
    %364 = vmatpush1.msra.mxu0 0.0
    %365 = vmatprep.subr.mxu0 0.0
    %366 = vmatpush1.msra.mxu0 0.0
    %367 = vmatprep.subr.mxu0 0.0
    %368 = vmatpush1.msra.mxu0 0.0
    %369 = vmatprep.subr.mxu0 0.0
    %370 = vmatpush1.msra.mxu0 0.0
    %371 = vmatprep.subr.mxu0 0.0
    %372 = vmatpush1.msra.mxu0 0.0
    %373 = vmatprep.subr.mxu0 0.0
    %374 = vmatpush1.msra.mxu0 0.0
    %375 = vmatprep.subr.mxu0 0.0
    %376 = vmatpush1.msra.mxu0 0.0
    %377 = vmatprep.subr.mxu0 0.0
    %378 = vmatpush1.msra.mxu0 0.0
    %379 = vmatprep.subr.mxu0 0.0
    %380 = vmatpush1.msra.mxu0 0.0
    %381 = vmatprep.subr.mxu0 0.0
    %382 = vmatpush1.msra.mxu0 0.0
    %383 = vmatprep.subr.mxu0 0.0
    %384 = vmatpush1.msra.mxu0 0.0
    %385 = vmatprep.subr.mxu0 0.0
    %386 = vmatpush1.msra.mxu0 0.0
    %387 = vmatprep.subr.mxu0 0.0
    %388 = vmatpush1.msra.mxu0 0.0
    %389 = vmatprep.subr.mxu0 0.0
    %390 = vmatpush1.msra.mxu0 0.0
    %391 = vmatprep.mubr.f32.mxu0 0.0
    %392 = vmatmul.mubr.f32.gmra.mrb[0].mxu0 %v322
    %v393 = vpop.f32.mrb[0].mxu0
    %v394 = vadd.f32 %v314, %v393
    %v395 = vpop.f32.mrb[0].mxu0
    %v396 = vadd.f32 %v314, %v395
    %397 = vmatprep.mubr.f32.mxu0 0.0
    %398 = vmatmul.mubr.f32.gmra.mrb[0].mxu0 %v325
    %v399 = vpop.f32.mrb[0].mxu0
    %v400 = vadd.f32 %v319, %v399
    %v401 = vpop.f32.mrb[0].mxu0
    %v402 = vadd.f32 %v319, %v401
    %403 = vdwg.mxu0
    %404 = vst [vmem:[#allocation2] sm:$0xff] %v394
    %405 = vst [vmem:[#allocation2 + $0x8] sm:$0xff] %v396
    %406 = vst [vmem:[#allocation2 + $0x10] sm:$0xff] %v400
    %407 = vst [vmem:[#allocation2 + $0x18] sm:$0xff] %v402
    // Predicated region
    $region30: #{tpu_custom_call.1} parent=1 // pred_check
      _
    $region31: #{tpu_custom_call.1} parent=1 // pred_check_branch
      %409 = sbr.rel (0) target = $region33
    $region32: #{tpu_custom_call.1} parent=1 // pred_region
      %s411 = ssub.s32 512, 512
      %412 = vsyncadd [#allocation3], %s411
      %s413 = sshll.u32 [#allocation2], 4
      %s414 = int_to_ptr.vmem [resolvable:$true] %s413
      %419 = dma.vmem_to_hbm [thread:$0]  %s414, 512, %s7, [#allocation3], 256, 256, 16
    $region33: #{tpu_custom_call.1} parent=1 // pred_fallthru
      _
    // Predicated region
    $region34: #{tpu_custom_call.1} parent=1 // pred_check
      _
    $region35: #{tpu_custom_call.1} parent=1 // pred_check_branch
      %421 = sbr.rel (0) target = $region37
    $region36: #{tpu_custom_call.1} parent=1 // pred_region
      %422 = dma.done [#allocation3], 512
    $region37: #{tpu_custom_call.1} parent=1 // pred_fallthru
      _
    %423 = vsyncpa [#allocation3], 1

</llo_original>
